<compile_context>
chip_gen: v7x
topology: tpu7x:2x2x1
jax: 0.10.0
libtpu: 0.0.40
codegen_flags: <defaults>
</compile_context>

<pallas_src>
import functools

import jax
import jax.numpy as jnp
from jax.experimental import pallas as pl
from jax.experimental.pallas import tpu as pltpu


def _round_up(x, m):
    return ((x + m - 1) // m) * m


def _layernorm_nct_kernel(x_ref, g_ref, b_ref, o_ref, *, eps, c):
    # x_ref: (1, C, tile_t) block of z in native NCT layout.
    # C -> sublanes (reduced axis), tile_t -> lanes (dense loads/stores).
    x = x_ref[0].astype(jnp.float32)                                    # (C, tile_t)

    mu = jnp.sum(x, axis=0, keepdims=True) * jnp.float32(1.0 / c)       # (1, tile_t)
    d = x - mu
    # unbiased variance (torch.std default): divide by (C - 1)
    var = jnp.sum(d * d, axis=0, keepdims=True) * jnp.float32(1.0 / (c - 1))
    # reciprocal on the small (1, tile_t) row; full tile gets a VPU multiply
    inv = pl.reciprocal(jnp.sqrt(var) + jnp.float32(eps), approx=False)  # (1, tile_t)

    g = g_ref[...].astype(jnp.float32)                                  # (C, 1)
    b = b_ref[...].astype(jnp.float32)                                  # (C, 1)

    o_ref[0] = (d * inv * g + b).astype(o_ref.dtype)


def layer_norm(z, gamma, beta, eps=1e-8, *, target_block_bytes=4 << 20):
    """z: (B, C, T) float array. gamma, beta: (C,). Returns (B, C, T)."""
    B, C, T = z.shape
    if C < 2:
        # torch.std with dim size 1 is NaN (divide by C-1); refuse instead.
        raise ValueError("LayerNorm requires C >= 2 for unbiased std.")
    itemsize = jnp.dtype(z.dtype).itemsize

    # Lane-dense tile along T: multiple of 128, sized so the fp32 working set of
    # one (C, tile_t) block is ~target_block_bytes (capped by the padded T extent).
    f32_row_bytes = C * 4
    tile_t = max(128, (target_block_bytes // f32_row_bytes) // 128 * 128)
    tile_t = min(tile_t, _round_up(T, 128))

    # v7x megacore: make sure the grid has at least 2 steps when possible so
    # both TensorCores get work (no-op on v5e/v6e's single TC).
    if B == 1 and T > 128:
        tile_t = min(tile_t, max(128, _round_up(pl.cdiv(T, 2), 128)))

    num_t = pl.cdiv(T, tile_t)  # last block may be ragged; OOB lanes are dropped

    # VMEM budget: in + out double-buffered plus conservative f32 scratch.
    block_io_bytes = C * tile_t * itemsize
    est = 4 * block_io_bytes + 2 * C * tile_t * 4
    # 32 MiB is safe on all generations (v7x: 64 MiB physical / 32 MiB default
    # scoped; v5e/v6e: 128 MiB physical) and lifts v5e's 16 MiB scoped default.
    vmem_limit = max(32 << 20, min(_round_up(est + (4 << 20), 1 << 20), 56 << 20))
    # TODO(synk): very wide C (tile_t floored at 128 and est >> 32 MiB) needs a
    # C-tiled two-pass-statistics path; not required at these shapes.

    g2 = gamma.reshape(C, 1)
    b2 = beta.reshape(C, 1)

    kernel = functools.partial(_layernorm_nct_kernel, eps=float(eps), c=C)

    return pl.pallas_call(
        kernel,
        out_shape=jax.ShapeDtypeStruct((B, C, T), z.dtype),
        grid_spec=pltpu.PrefetchScalarGridSpec(
            num_scalar_prefetch=0,
            grid=(B, num_t),
            in_specs=[
                pl.BlockSpec((1, C, tile_t), lambda b, t: (b, 0, t)),
                pl.BlockSpec((C, 1), lambda b, t: (0, 0)),
                pl.BlockSpec((C, 1), lambda b, t: (0, 0)),
            ],
            out_specs=pl.BlockSpec((1, C, tile_t), lambda b, t: (b, 0, t)),
        ),
        compiler_params=pltpu.CompilerParams(
            dimension_semantics=("parallel", "parallel"),
            vmem_limit_bytes=vmem_limit,
        ),
    )(z, g2, b2)


def _reference(z, gamma, beta, eps=1e-8):
    # pure-JAX reference mirroring the PyTorch forward
    zt = jnp.transpose(z, (0, 2, 1))
    mu = jnp.mean(zt, axis=-1, keepdims=True)
    std = jnp.sqrt(jnp.sum((zt - mu) ** 2, axis=-1, keepdims=True) / (zt.shape[-1] - 1))
    out = (zt - mu) / (std + eps)
    out = out * gamma + beta
    return jnp.transpose(out, (0, 2, 1))


if __name__ == "__main__":
    # size = C = 32, matching nn.Parameter(torch.ones(size)/zeros(size))
    C = 32
    gamma = jnp.ones((C,), dtype=jnp.float32)
    beta = jnp.zeros((C,), dtype=jnp.float32)

    # small main case
    B, T = 2, 16
    z = jax.random.normal(jax.random.PRNGKey(0), (B, C, T), dtype=jnp.float32)
    out = jax.block_until_ready(layer_norm(z, gamma, beta, eps=1e-8))
    ref = _reference(z, gamma, beta, eps=1e-8)
    assert out.shape == (B, C, T)
    assert jnp.allclose(out, ref, atol=1e-5, rtol=1e-5)

    # non-128-multiple T exercises the ragged (no-pad) tail block
    B2, T2 = 2, 300
    z2 = jax.random.normal(jax.random.PRNGKey(1), (B2, C, T2), dtype=jnp.float32)
    out2 = jax.block_until_ready(layer_norm(z2, gamma, beta, eps=1e-8))
    ref2 = _reference(z2, gamma, beta, eps=1e-8)
    assert out2.shape == (B2, C, T2)
    assert jnp.allclose(out2, ref2, atol=1e-5, rtol=1e-5)

    # B == 1 exercises the "force >= 2 grid steps" megacore path + ragged tail
    B3, T3 = 1, 300
    z3 = jax.random.normal(jax.random.PRNGKey(2), (B3, C, T3), dtype=jnp.float32)
    out3 = jax.block_until_ready(layer_norm(z3, gamma, beta, eps=1e-8))
    ref3 = _reference(z3, gamma, beta, eps=1e-8)
    assert out3.shape == (B3, C, T3)
    assert jnp.allclose(out3, ref3, atol=1e-5, rtol=1e-5)

    print("KERNEL_OK")
</pallas_src>

<mosaic_0001>
module attributes {stable_mosaic.version = 11 : i64} {
  func.func @_layernorm_nct_kernel(%arg0: i32, %arg1: i32, %arg2: memref<1x32x128xf32, #tpu.memory_space<vmem>>, %arg3: memref<32x1xf32, #tpu.memory_space<vmem>>, %arg4: memref<32x1xf32, #tpu.memory_space<vmem>>, %arg5: memref<1x32x128xf32, #tpu.memory_space<vmem>>) attributes {dimension_semantics = [#tpu.dimension_semantics<parallel>, #tpu.dimension_semantics<parallel>], iteration_bounds = array<i64: 2, 1>, scalar_prefetch = 0 : i64, scratch_operands = 0 : i64, tpu.core_type = #tpu.core_type<tc>, window_params = [{transform_indices = @transform_0, window_bounds = array<i64: 1, 32, 128>}, {pipeline_mode = #tpu.pipeline_mode<synchronous>, transform_indices = @transform_1, window_bounds = array<i64: 32, 1>}, {pipeline_mode = #tpu.pipeline_mode<synchronous>, transform_indices = @transform_2, window_bounds = array<i64: 32, 1>}, {transform_indices = @transform_3, window_bounds = array<i64: 1, 32, 128>}]} {
    %c0 = arith.constant 0 : index
    %c0_0 = arith.constant 0 : index
    %c0_1 = arith.constant 0 : index
    %0 = vector.load %arg2[%c0, %c0_0, %c0_1] : memref<1x32x128xf32, #tpu.memory_space<vmem>>, vector<1x32x128xf32>
    %1 = vector.shape_cast %0 : vector<1x32x128xf32> to vector<32x128xf32>
    %cst = arith.constant dense<0.000000e+00> : vector<128xf32>
    %2 = vector.multi_reduction <add>, %1, %cst [0] : vector<32x128xf32> to vector<128xf32>
    %3 = vector.shape_cast %2 : vector<128xf32> to vector<1x128xf32>
    %cst_2 = arith.constant 3.125000e-02 : f32
    %4 = vector.broadcast %cst_2 : f32 to vector<1x128xf32>
    %5 = arith.mulf %3, %4 : vector<1x128xf32>
    %6 = vector.broadcast %5 : vector<1x128xf32> to vector<32x128xf32>
    %7 = arith.subf %1, %6 : vector<32x128xf32>
    %8 = arith.mulf %7, %7 : vector<32x128xf32>
    %cst_3 = arith.constant dense<0.000000e+00> : vector<128xf32>
    %9 = vector.multi_reduction <add>, %8, %cst_3 [0] : vector<32x128xf32> to vector<128xf32>
    %10 = vector.shape_cast %9 : vector<128xf32> to vector<1x128xf32>
    %cst_4 = arith.constant 0.0322580636 : f32
    %11 = vector.broadcast %cst_4 : f32 to vector<1x128xf32>
    %12 = arith.mulf %10, %11 : vector<1x128xf32>
    %13 = math.sqrt %12 : vector<1x128xf32>
    %cst_5 = arith.constant 9.99999993E-9 : f32
    %14 = vector.broadcast %cst_5 : f32 to vector<1x128xf32>
    %15 = arith.addf %13, %14 : vector<1x128xf32>
    %16 = tpu.reciprocal %15 : vector<1x128xf32> -> vector<1x128xf32>
    %c0_6 = arith.constant 0 : index
    %c0_7 = arith.constant 0 : index
    %17 = vector.load %arg3[%c0_6, %c0_7] : memref<32x1xf32, #tpu.memory_space<vmem>>, vector<32x1xf32>
    %c0_8 = arith.constant 0 : index
    %c0_9 = arith.constant 0 : index
    %18 = vector.load %arg4[%c0_8, %c0_9] : memref<32x1xf32, #tpu.memory_space<vmem>>, vector<32x1xf32>
    %19 = vector.broadcast %16 : vector<1x128xf32> to vector<32x128xf32>
    %20 = arith.mulf %7, %19 : vector<32x128xf32>
    %21 = vector.broadcast %17 : vector<32x1xf32> to vector<32x128xf32>
    %22 = arith.mulf %20, %21 : vector<32x128xf32>
    %23 = vector.broadcast %18 : vector<32x1xf32> to vector<32x128xf32>
    %24 = arith.addf %22, %23 : vector<32x128xf32>
    %c0_10 = arith.constant 0 : index
    %c0_11 = arith.constant 0 : index
    %c0_12 = arith.constant 0 : index
    %25 = vector.load %arg5[%c0_10, %c0_11, %c0_12] : memref<1x32x128xf32, #tpu.memory_space<vmem>>, vector<1x32x128xf32>
    %26 = vector.shape_cast %25 : vector<1x32x128xf32> to vector<32x128xf32>
    %27 = vector.shape_cast %24 : vector<32x128xf32> to vector<1x32x128xf32>
    tpu.vector_store %arg5[%c0_10, %c0_11, %c0_12], %27 {strides = array<i32>} : memref<1x32x128xf32, #tpu.memory_space<vmem>>, vector<1x32x128xf32>,
    return
  }
  func.func @transform_0(%arg0: i32, %arg1: i32) -> (i32, i32, i32) {
    %c0_i32 = arith.constant 0 : i32
    %c0_i32_0 = arith.constant 0 : i32
    return %arg0, %c0_i32, %arg1 : i32, i32, i32
  }
  func.func @transform_1(%arg0: i32, %arg1: i32) -> (i32, i32) {
    %c0_i32 = arith.constant 0 : i32
    %c0_i32_0 = arith.constant 0 : i32
    %c0_i32_1 = arith.constant 0 : i32
    return %c0_i32, %c0_i32_0 : i32, i32
  }
  func.func @transform_2(%arg0: i32, %arg1: i32) -> (i32, i32) {
    %c0_i32 = arith.constant 0 : i32
    %c0_i32_0 = arith.constant 0 : i32
    %c0_i32_1 = arith.constant 0 : i32
    return %c0_i32, %c0_i32_0 : i32, i32
  }
  func.func @transform_3(%arg0: i32, %arg1: i32) -> (i32, i32, i32) {
    %c0_i32 = arith.constant 0 : i32
    %c0_i32_0 = arith.constant 0 : i32
    return %arg0, %c0_i32, %arg1 : i32, i32, i32
  }
}

</mosaic_0001>

<llo_original>
// kernel: tpu_custom_call.1
$region0: #{tpu_custom_call.1}
  #allocation0 [shape = 'u32[]', space=smem, size = 0x4, offset = 0x4, fixed_abs, tag = 'smem constant byte address 0x4 - core index']
  #allocation1 [shape = 'u32[144,128]{1,0:T(1,128)}', space=vmem, size = 0x12000, scoped, tag = 'internal scratch']
  %s0 = inlined_call_operand.vmem [shape: f32[2,32,16], index: 0, kind: input, shape index: {}]
  %s1 = inlined_call_operand.vmem [shape: f32[32,1], index: 1, kind: input, shape index: {}]
  %s2 = inlined_call_operand.vmem [shape: f32[32,1], index: 2, kind: input, shape index: {}]
  %s3 = inlined_call_operand.vmem [shape: f32[2,32,16], index: 3, kind: output, shape index: {}]
  %s4 = sld [smem:[#allocation0]]
  $region45: #{tpu_custom_call.1} parent=0
    _
  %s6 = ssub.s32 1, %s4
  %s7 = scalar_select 0, %s6, %s4
  loop: start=0, step=1, limit=4
  $region2: #{tpu_custom_call.1} parent=0 // loop_pre_header
    _
  $region3: #{tpu_custom_call.1} parent=0 // loop_header
    %s9 = sphi 0, %s13
    %p10 = scmp.ge.s32.totalorder %s9, 4
    %s16 = sphi 0, %s28
    %s17 = sphi 0, %s24
    %s18 = sphi 0, %s16
    %s19 = sphi 0, %s17
    %s20 = sphi 0, %s18
    %s21 = sphi 0, %s19
    %s33 = sphi 0, %s35
    %s36 = sphi 0, %s33
    %s37 = sphi 0, %s36
    %s53 = sphi 0, %s37
    %s57 = sphi 0, %s57
    %s59 = sphi 0, %s57
    %s60 = sphi 0, %s59
    %s74 = sphi 0, %s60
    %s78 = sphi 0, %s78
    %s80 = sphi 0, %s78
    %s81 = sphi 0, %s80
    %s95 = sphi 0, %s81
    %s103 = sphi 0, %s105
    %s106 = sphi 0, %s103
    %s107 = sphi 0, %s106
    %s123 = sphi 0, %s107
  $region4: #{tpu_custom_call.1} parent=0 // loop_header_branch
    %12 = sbr.rel (%p10) target = $region8
  $region5: #{tpu_custom_call.1} parent=0 // loop_body
    %s14 = ssub.s32 %s9, 1
    %s15 = ssub.s32 %s9, 2
    %s22 = sadd.s32 1, %s17
    %p23 = scmp.ge.s32.totalorder %s22, 1
    %s24 = scalar_select %p23, 0, %s22
    %s25 = sadd.s32 1, %s16
    %s26 = scalar_select %p23, %s25, %s16
    %p27 = scmp.ge.s32.totalorder %s26, 2
    %s28 = scalar_select %p27, 0, %s26
    %s29 = ssub.s32 %s16, %s28
    %s30 = ssub.s32 %s17, %s24
    %s31 = sor.u32 %s29, %s30
    %p32 = scmp.eq.s32.totalorder %s31, 0
    %s34 = sadd.s32 %s33, 1
    %s35 = scalar_select %p32, %s33, %s34
    %p38 = pneg %p32
    %p39 = scmp.eq.s32.totalorder %s9, 1
    %p40 = por %p38, %p39
    %p41 = scmp.ne.s32.totalorder %s33, %s36
    %p42 = scmp.eq.s32.totalorder %s9, 0
    %p43 = por %p41, %p42
    %p44 = scmp.ne.s32.totalorder %s33, %s36
    %p45 = scmp.eq.s32.totalorder %s14, 1
    %p46 = por %p44, %p45
    %p47 = scmp.ne.s32.totalorder %s36, %s37
    %p48 = scmp.eq.s32.totalorder %s14, 0
    %p49 = por %p47, %p48
    %p50 = scmp.ne.s32.totalorder %s36, %s37
    %p51 = scmp.eq.s32.totalorder %s15, 1
    %p52 = por %p50, %p51
    %p54 = scmp.ne.s32.totalorder %s37, %s53
    %p55 = scmp.eq.s32.totalorder %s15, 0
    %p56 = por %p54, %p55
    %s58 = sadd.s32 %s57, 1
    %p61 = scmp.eq.s32.totalorder %s9, 1
    %p62 = scmp.ne.s32.totalorder %s57, %s59
    %p63 = scmp.eq.s32.totalorder %s9, 0
    %p64 = por %p62, %p63
    %p65 = scmp.ne.s32.totalorder %s57, %s59
    %p66 = scmp.eq.s32.totalorder %s14, 1
    %p67 = por %p65, %p66
    %p68 = scmp.ne.s32.totalorder %s59, %s60
    %p69 = scmp.eq.s32.totalorder %s14, 0
    %p70 = por %p68, %p69
    %p71 = scmp.ne.s32.totalorder %s59, %s60
    %p72 = scmp.eq.s32.totalorder %s15, 1
    %p73 = por %p71, %p72
    %p75 = scmp.ne.s32.totalorder %s60, %s74
    %p76 = scmp.eq.s32.totalorder %s15, 0
    %p77 = por %p75, %p76
    %s79 = sadd.s32 %s78, 1
    %p82 = scmp.eq.s32.totalorder %s9, 1
    %p83 = scmp.ne.s32.totalorder %s78, %s80
    %p84 = scmp.eq.s32.totalorder %s9, 0
    %p85 = por %p83, %p84
    %p86 = scmp.ne.s32.totalorder %s78, %s80
    %p87 = scmp.eq.s32.totalorder %s14, 1
    %p88 = por %p86, %p87
    %p89 = scmp.ne.s32.totalorder %s80, %s81
    %p90 = scmp.eq.s32.totalorder %s14, 0
    %p91 = por %p89, %p90
    %p92 = scmp.ne.s32.totalorder %s80, %s81
    %p93 = scmp.eq.s32.totalorder %s15, 1
    %p94 = por %p92, %p93
    %p96 = scmp.ne.s32.totalorder %s81, %s95
    %p97 = scmp.eq.s32.totalorder %s15, 0
    %p98 = por %p96, %p97
    %s99 = ssub.s32 %s16, %s28
    %s100 = ssub.s32 %s17, %s24
    %s101 = sor.u32 %s99, %s100
    %p102 = scmp.eq.s32.totalorder %s101, 0
    %s104 = sadd.s32 %s103, 1
    %s105 = scalar_select %p102, %s103, %s104
    %p108 = pneg %p102
    %p109 = scmp.eq.s32.totalorder %s9, 1
    %p110 = por %p108, %p109
    %p111 = scmp.ne.s32.totalorder %s103, %s106
    %p112 = scmp.eq.s32.totalorder %s9, 0
    %p113 = por %p111, %p112
    %p114 = scmp.ne.s32.totalorder %s103, %s106
    %p115 = scmp.eq.s32.totalorder %s14, 1
    %p116 = por %p114, %p115
    %p117 = scmp.ne.s32.totalorder %s106, %s107
    %p118 = scmp.eq.s32.totalorder %s14, 0
    %p119 = por %p117, %p118
    %p120 = scmp.ne.s32.totalorder %s106, %s107
    %p121 = scmp.eq.s32.totalorder %s15, 1
    %p122 = por %p120, %p121
    %p124 = scmp.ne.s32.totalorder %s107, %s123
    %p125 = scmp.eq.s32.totalorder %s15, 0
    %p126 = por %p124, %p125
    %p127 = scmp.le.s32.totalorder 1, %s9
    %p128 = scmp.lt.s32.totalorder %s9, 3
    %p129 = pnand %p127, %p128
    %p130 = pneg %p129
    // Predicated region
    $region9: #{tpu_custom_call.1} parent=5 // pred_check
      _
    $region10: #{tpu_custom_call.1} parent=5 // pred_check_branch
      %132 = sbr.rel (%p129) target = $region12
    $region11: #{tpu_custom_call.1} parent=5 // pred_region
      %s133 = ssub.s32 %s9, 1
      // Predicated region
      $region13: #{tpu_custom_call.1} parent=11 // pred_check
        %p134 = pneg %p70
      $region14: #{tpu_custom_call.1} parent=11 // pred_check_branch
        %136 = sbr.rel (%p134) target = $region16
      $region15: #{tpu_custom_call.1} parent=11 // pred_region
        _
      $region16: #{tpu_custom_call.1} parent=11 // pred_fallthru
        _
      // Predicated region
      $region17: #{tpu_custom_call.1} parent=11 // pred_check
        %p137 = pneg %p91
      $region18: #{tpu_custom_call.1} parent=11 // pred_check_branch
        %139 = sbr.rel (%p137) target = $region20
      $region19: #{tpu_custom_call.1} parent=11 // pred_region
        _
      $region20: #{tpu_custom_call.1} parent=11 // pred_fallthru
        _
    $region12: #{tpu_custom_call.1} parent=5 // pred_fallthru
      _
    %p140 = scmp.lt.s32.totalorder %s9, 2
    // Predicated region
    $region21: #{tpu_custom_call.1} parent=5 // pred_check
      %p141 = pneg %p140
    $region22: #{tpu_custom_call.1} parent=5 // pred_check_branch
      %143 = sbr.rel (%p141) target = $region24
    $region23: #{tpu_custom_call.1} parent=5 // pred_region
      // Predicated region
      $region25: #{tpu_custom_call.1} parent=23 // pred_check
        %p144 = pneg %p43
      $region26: #{tpu_custom_call.1} parent=23 // pred_check_branch
        %146 = sbr.rel (%p144) target = $region28
      $region27: #{tpu_custom_call.1} parent=23 // pred_region
        %p147 = scmp.lt.s32.totalorder %s16, 1
        %s148 = scalar_select %p147, %s16, 1
        %p149 = scmp.lt.s32.totalorder %s17, 0
        %s150 = scalar_select %p149, %s17, 0
        %s151 = smul.addr %s148, 4
        %s152 = sadd.s32 %s150, %s151
        %s153 = smul.addr %s152, 8
        %s154 = scalar_lea.vmem %s0, %s153
      $region28: #{tpu_custom_call.1} parent=23 // pred_fallthru
        _
    $region24: #{tpu_custom_call.1} parent=5 // pred_fallthru
      _
    %p155 = scmp.le.s32.totalorder 1, %s9
    %p156 = scmp.lt.s32.totalorder %s9, 3
    %p157 = pnand %p155, %p156
    %p158 = pneg %p157
    // Predicated region
    $region29: #{tpu_custom_call.1} parent=5 // pred_check
      _
    $region30: #{tpu_custom_call.1} parent=5 // pred_check_branch
      %160 = sbr.rel (%p157) target = $region32
    $region31: #{tpu_custom_call.1} parent=5 // pred_region
      %s161 = ssub.s32 %s9, 1
      %p162 = scmp.lt.s32.totalorder %s18, 1
      %s163 = scalar_select %p162, %s18, 1
      %p164 = scmp.lt.s32.totalorder %s19, 0
      %s165 = scalar_select %p164, %s19, 0
      %s166 = smul.addr %s163, 4
      %s167 = sadd.s32 %s165, %s166
      %s168 = smul.addr %s167, 8
      %s169 = scalar_lea.vmem %s0, %s168
      %p170 = pneg %p49
      %p171 = pneg %p46
      %p172 = pneg %p70
      %p173 = pneg %p67
      %p174 = pneg %p91
      %p175 = pneg %p88
      %p176 = pneg %p119
      %p177 = pneg %p116
      %p178 = scmp.lt.s32.totalorder %s18, 1
      %s179 = scalar_select %p178, %s18, 1
      %p180 = scmp.lt.s32.totalorder %s19, 0
      %s181 = scalar_select %p180, %s19, 0
      %s182 = smul.addr %s179, 4
      %s183 = sadd.s32 %s181, %s182
      %s184 = smul.addr %s183, 8
      %s185 = scalar_lea.vmem %s3, %s184
      %p186 = scmp.lt.s32.totalorder %s18, 1
      %s187 = scalar_select %p186, %s18, 1
      %p188 = scmp.lt.s32.totalorder %s19, 0
      %s189 = scalar_select %p188, %s19, 0
      %s190 = smul.addr %s187, 4
      %s191 = sadd.s32 %s189, %s190
      %s192 = smul.addr %s191, 8
      %s193 = scalar_lea.vmem %s0, %s192
      %p194 = scmp.lt.s32.totalorder %s18, 1
      %s195 = scalar_select %p194, %s18, 1
      %p196 = scmp.lt.s32.totalorder %s19, 0
      %s197 = scalar_select %p196, %s19, 0
      %s198 = smul.addr %s195, 4
      %s199 = sadd.s32 %s197, %s198
      %s200 = smul.addr %s199, 8
      %s201 = scalar_lea.vmem %s3, %s200
      %v202 = vld [vmem:[%s193] sm:$0xff]
      %v203 = vld [vmem:[%s193 + $0x8] sm:$0xff]
      %v204 = vld [vmem:[%s193 + $0x10] sm:$0xff]
      %v205 = vld [vmem:[%s193 + $0x18] sm:$0xff]
      %v206 = vadd.f32 %v202, %v203
      %v207 = vadd.f32 %v206, %v204
      %v208 = vadd.f32 %v207, %v205
      %v209 = vrot.slane %v208, 4
      %v210 = vadd.f32 %v208, %v209
      %v211 = vrot.slane %v210, 2
      %v212 = vadd.f32 %v210, %v211
      %v213 = vrot.slane %v212, 1
      %v214 = vadd.f32 %v212, %v213
      %v215 = vmul.f32 %v214, 0.03125
      %v216 = vsub.f32 %v202, %v215
      %v217 = vsub.f32 %v203, %v215
      %v218 = vsub.f32 %v204, %v215
      %v219 = vsub.f32 %v205, %v215
      %v220 = vmul.f32 %v216, %v216
      %v221 = vmul.f32 %v217, %v217
      %v222 = vmul.f32 %v218, %v218
      %v223 = vmul.f32 %v219, %v219
      %v224 = vadd.f32 %v220, %v221
      %v225 = vadd.f32 %v224, %v222
      %v226 = vadd.f32 %v225, %v223
      %v227 = vrot.slane %v226, 4
      %v228 = vadd.f32 %v226, %v227
      %v229 = vrot.slane %v228, 2
      %v230 = vadd.f32 %v228, %v229
      %v231 = vrot.slane %v230, 1
      %v232 = vadd.f32 %v230, %v231
      %v233 = vmul.f32 %v232, 0.032258064
      %v234 = vrsqrt.pop %v233
      %v235 = vmul.f32 %v233, %v234
      %vm236 = vcmp.eq.f32.partialorder %v233, inf
      %v237 = vsel %vm236, %v233, %v235
      %vm238 = vcmp.eq.f32.partialorder %v233, 0.0
      %v239 = vand.u32 %v233, 2147483648
      %v240 = vsel %vm238, %v239, %v237
      %v241 = vadd.f32 %v240, 1e-08
      %v242 = vrcp.pop %v241
      %v243 = vld [vmem:[%s1] sm:$0xff]
      %v244 = vld [vmem:[%s1 + $0x8] sm:$0xff]
      %v245 = vld [vmem:[%s1 + $0x10] sm:$0xff]
      %v246 = vld [vmem:[%s1 + $0x18] sm:$0xff]
      %v247 = vld [vmem:[%s2] sm:$0xff]
      %v248 = vld [vmem:[%s2 + $0x8] sm:$0xff]
      %v249 = vld [vmem:[%s2 + $0x10] sm:$0xff]
      %v250 = vld [vmem:[%s2 + $0x18] sm:$0xff]
      %v251 = vmul.f32 %v216, %v242
      %v252 = vmul.f32 %v217, %v242
      %v253 = vmul.f32 %v218, %v242
      %v254 = vmul.f32 %v219, %v242
      %256 = vset.pattern.permute.xlu0 0
      %257 = vperm.xlu0 %256, %v243
      %v258 = vpop.permute.xlu0 %257
      %261 = vset.pattern.permute.xlu0 0
      %262 = vperm.xlu0 %261, %v244
      %v263 = vpop.permute.xlu0 %262
      %266 = vset.pattern.permute.xlu0 0
      %267 = vperm.xlu0 %266, %v245
      %v268 = vpop.permute.xlu0 %267
      %271 = vset.pattern.permute.xlu0 0
      %272 = vperm.xlu0 %271, %v246
      %v273 = vpop.permute.xlu0 %272
      %v275 = vmul.f32 %v251, %v258
      %v276 = vmul.f32 %v252, %v263
      %v277 = vmul.f32 %v253, %v268
      %v278 = vmul.f32 %v254, %v273
      %280 = vset.pattern.permute.xlu0 0
      %281 = vperm.xlu0 %280, %v247
      %v282 = vpop.permute.xlu0 %281
      %285 = vset.pattern.permute.xlu0 0
      %286 = vperm.xlu0 %285, %v248
      %v287 = vpop.permute.xlu0 %286
      %290 = vset.pattern.permute.xlu0 0
      %291 = vperm.xlu0 %290, %v249
      %v292 = vpop.permute.xlu0 %291
      %295 = vset.pattern.permute.xlu0 0
      %296 = vperm.xlu0 %295, %v250
      %v297 = vpop.permute.xlu0 %296
      %v299 = vadd.f32 %v275, %v282
      %v300 = vadd.f32 %v276, %v287
      %v301 = vadd.f32 %v277, %v292
      %v302 = vadd.f32 %v278, %v297
      %303 = vst [vmem:[%s201] sm:$0xff] %v299
      %304 = vst [vmem:[%s201 + $0x8] sm:$0xff] %v300
      %305 = vst [vmem:[%s201 + $0x10] sm:$0xff] %v301
      %306 = vst [vmem:[%s201 + $0x18] sm:$0xff] %v302
      %p307 = scmp.lt.s32.totalorder %s18, 1
      %s308 = scalar_select %p307, %s18, 1
      %p309 = scmp.lt.s32.totalorder %s19, 0
      %s310 = scalar_select %p309, %s19, 0
      %s311 = smul.addr %s308, 4
      %s312 = sadd.s32 %s310, %s311
      %s313 = smul.addr %s312, 8
      %s314 = scalar_lea.vmem %s3, %s313
      // Predicated region
      $region33: #{tpu_custom_call.1} parent=31 // pred_check
        %p315 = pneg %p116
      $region34: #{tpu_custom_call.1} parent=31 // pred_check_branch
        %317 = sbr.rel (%p315) target = $region36
      $region35: #{tpu_custom_call.1} parent=31 // pred_region
        _
      $region36: #{tpu_custom_call.1} parent=31 // pred_fallthru
        _
    $region32: #{tpu_custom_call.1} parent=5 // pred_fallthru
      _
    %p318 = scmp.le.s32.totalorder 2, %s9
    // Predicated region
    $region37: #{tpu_custom_call.1} parent=5 // pred_check
      %p319 = pneg %p318
    $region38: #{tpu_custom_call.1} parent=5 // pred_check_branch
      %321 = sbr.rel (%p319) target = $region40
    $region39: #{tpu_custom_call.1} parent=5 // pred_region
      %s322 = ssub.s32 %s9, 2
      // Predicated region
      $region41: #{tpu_custom_call.1} parent=39 // pred_check
        %p323 = pneg %p122
      $region42: #{tpu_custom_call.1} parent=39 // pred_check_branch
        %325 = sbr.rel (%p323) target = $region44
      $region43: #{tpu_custom_call.1} parent=39 // pred_region
        %p326 = scmp.lt.s32.totalorder %s20, 1
        %s327 = scalar_select %p326, %s20, 1
        %p328 = scmp.lt.s32.totalorder %s21, 0
        %s329 = scalar_select %p328, %s21, 0
        %s330 = smul.addr %s327, 4
        %s331 = sadd.s32 %s329, %s330
        %s332 = smul.addr %s331, 8
        %s333 = scalar_lea.vmem %s3, %s332
      $region44: #{tpu_custom_call.1} parent=39 // pred_fallthru
        _
    $region40: #{tpu_custom_call.1} parent=5 // pred_fallthru
      _
  $region6: #{tpu_custom_call.1} parent=0 // loop_footer
    %s13 = sadd.s32 1, %s9
  $region7: #{tpu_custom_call.1} parent=0 // loop_footer_branch
    %8 = sbr.rel target = $region3
  $region8: #{tpu_custom_call.1} parent=0 // loop_exit
    _

</llo_original>
